<compile_context>
chip_gen: v7x
topology: tpu7x:2x2x1
jax: 0.10.0
libtpu: 0.0.40
codegen_flags: <defaults>
</compile_context>

<pallas_src>
import functools

import jax
import jax.numpy as jnp
from jax.experimental import pallas as pl
from jax.experimental.pallas import tpu as pltpu

_LANES = 128
_MAX_TILE_ROWS = 512        # upper bound on rows per grid step (rows * 128 pixels).
_TILE_BYTES = 4 << 20       # target <= ~4 MiB for the logits tile (double-buffered).
_SMOOTH = 1e-5


def _dice_loss_kernel(x_ref, t_ref, w_ref, out_ref,
                      inter_acc, y_acc, z_acc,
                      *, n_classes, softmax, hw, tile_rows, mask_pad):
    """Grid = (batch, row_tiles); row_tiles is a reduction into VMEM scratch."""
    r = pl.program_id(1)

    @pl.when(r == 0)
    def _init():
        inter_acc[...] = jnp.zeros_like(inter_acc)
        y_acc[...] = jnp.zeros_like(y_acc)
        z_acc[...] = jnp.zeros_like(z_acc)

    x = x_ref[...].astype(jnp.float32)            # (C, TR, 128), f32 accumulation
    t = t_ref[...].astype(jnp.int32)              # (TR, 128)

    if softmax:                                   # softmax over the class (leading) dim
        m = jnp.max(x, axis=0, keepdims=True)
        e = jnp.exp(x - m)
        denom = jnp.sum(e, axis=0, keepdims=True)
        x = e * pl.reciprocal(denom, approx=True)     # EUP vrcp; frees VALU slots
        if mask_pad:
            # Padded pixels would become 1/C after softmax; zero them before z_sum.
            row = jax.lax.broadcasted_iota(jnp.int32, (tile_rows, _LANES), 0)
            lane = jax.lax.broadcasted_iota(jnp.int32, (tile_rows, _LANES), 1)
            flat = (r * tile_rows + row) * _LANES + lane
            x = jnp.where((flat < hw)[None, :, :], x, 0.0)

    # Label -> per-class match mask (padded label = -1 matches no class).
    cls_ids = jax.lax.broadcasted_iota(jnp.int32, (n_classes, 1, 1), 0)
    match = t[None, :, :] == cls_ids                              # (C, TR, 128) bool

    # Sublane reduce per tile; keep lane partials in the accumulators.
    inter_acc[...] += jnp.sum(jnp.where(match, x, 0.0), axis=1)   # (C, 128)
    y_acc[...] += jnp.sum(match.astype(jnp.float32), axis=1)      # one-hot^2 == one-hot
    z_acc[...] += jnp.sum(x * x, axis=1)

    @pl.when(r == pl.num_programs(1) - 1)
    def _finalize():
        inter = jnp.sum(inter_acc[...], axis=1, keepdims=True)    # (C, 1)
        y = jnp.sum(y_acc[...], axis=1, keepdims=True)
        z = jnp.sum(z_acc[...], axis=1, keepdims=True)
        dice = 1.0 - (2.0 * inter + _SMOOTH) / (z + y + _SMOOTH)  # (C, 1)
        loss_b = jnp.sum(dice * w_ref[...]) / n_classes           # scalar
        out_ref[...] = jnp.full((1, 1, _LANES), loss_b, dtype=jnp.float32)


def dice_loss(inputs, target, weight=None, softmax=False):
    """Pallas equivalent of DiceLoss(n_classes=C).forward(inputs, target, weight, softmax)."""
    B, C, H, W = inputs.shape
    assert target.shape == (B, H, W), (inputs.shape, target.shape)
    HW = H * W

    # Keep native bf16/f32 activations (kernel is HBM-bound); cast to f32 on-chip.
    x = inputs.reshape(B, C, HW)
    if x.dtype not in (jnp.float32, jnp.bfloat16):
        x = x.astype(jnp.float32)
    t_dtype = jnp.int8 if C <= 127 else jnp.int32
    t = target.reshape(B, HW).astype(t_dtype)

    # Lane-dense repack: HW -> (rows, 128); pad rows up to the row tile.
    n_rows = -(-HW // _LANES)
    # VMEM-aware row-tile cap: keep the logits tile around _TILE_BYTES.
    bytes_per_row = C * _LANES * jnp.dtype(x.dtype).itemsize
    cap = max(8, min(_MAX_TILE_ROWS, _TILE_BYTES // max(1, bytes_per_row)))
    cap = max(8, (cap // 8) * 8)                                   # sublane-aligned
    if n_rows <= cap:
        tile_rows = n_rows                                         # full-extent block is legal
    else:
        tile_rows = cap
        n_rows = -(-n_rows // tile_rows) * tile_rows
    hw_padded = n_rows * _LANES
    pad = hw_padded - HW
    if pad:
        x = jnp.pad(x, ((0, 0), (0, 0), (0, pad)))                 # pad logits with 0
        t = jnp.pad(t, ((0, 0), (0, pad)), constant_values=-1)     # pad labels with -1
    x = x.reshape(B, C, n_rows, _LANES)
    t = t.reshape(B, n_rows, _LANES)

    if weight is None:
        w = jnp.ones((C, 1), jnp.float32)
    else:
        w = jnp.asarray(weight, jnp.float32).reshape(C, 1)

    kernel = functools.partial(
        _dice_loss_kernel,
        n_classes=C, softmax=softmax, hw=HW, tile_rows=tile_rows,
        mask_pad=bool(softmax and pad))

    out = pl.pallas_call(
        kernel,
        out_shape=jax.ShapeDtypeStruct((B, 1, _LANES), jnp.float32),
        grid_spec=pltpu.PrefetchScalarGridSpec(
            num_scalar_prefetch=0,
            grid=(B, n_rows // tile_rows),
            in_specs=[
                pl.BlockSpec((pl.Squeezed(), C, tile_rows, _LANES),
                             lambda b, r: (b, 0, r, 0)),            # logits tile
                pl.BlockSpec((pl.Squeezed(), tile_rows, _LANES),
                             lambda b, r: (b, r, 0)),               # label tile
                pl.BlockSpec((C, 1), lambda b, r: (0, 0)),          # class weights (resident)
            ],
            out_specs=pl.BlockSpec((1, 1, _LANES), lambda b, r: (b, 0, 0)),
            scratch_shapes=[
                pltpu.VMEM((C, _LANES), jnp.float32),   # intersect lane-partials
                pltpu.VMEM((C, _LANES), jnp.float32),   # y_sum lane-partials
                pltpu.VMEM((C, _LANES), jnp.float32),   # z_sum lane-partials
            ],
        ),
        compiler_params=pltpu.CompilerParams(
            dimension_semantics=("parallel", "arbitrary"),
        ),
    )(x, t, w)
    return out[:, 0, 0]                                             # (B,) per-batch loss


def _dice_loss_ref(inputs, target, weight=None, softmax=False):
    """Pure-jnp reference mirroring the PyTorch module (f32 math)."""
    B, C, H, W = inputs.shape
    inputs = inputs.astype(jnp.float32)
    if softmax:
        inputs = jax.nn.softmax(inputs, axis=1)
    t_oh = (target[:, None, :, :] == jnp.arange(C)[None, :, None, None]).astype(jnp.float32)
    if weight is None:
        weight = [1.0] * C
    smooth = 1e-5
    loss = jnp.zeros((B,), jnp.float32)
    for i in range(C):
        s, tg = inputs[:, i], t_oh[:, i]
        inter = jnp.sum(s * tg, axis=(1, 2))
        y = jnp.sum(tg, axis=(1, 2))
        z = jnp.sum(s * s, axis=(1, 2))
        loss = loss + (1.0 - (2 * inter + smooth) / (z + y + smooth)) * weight[i]
    return loss / C


if __name__ == "__main__":
    key = jax.random.PRNGKey(0)
    k1, k2, k3, k4 = jax.random.split(key, 4)

    # Case 1: f32 logits, softmax=True (exercises in-kernel softmax + approx reciprocal).
    B, C, H, W = 2, 4, 16, 16
    inputs = jax.random.normal(k1, (B, C, H, W), jnp.float32)
    target = jax.random.randint(k2, (B, H, W), 0, C, jnp.int32)
    out = jax.block_until_ready(dice_loss(inputs, target, softmax=True))
    ref = _dice_loss_ref(inputs, target, softmax=True)
    assert out.shape == (B,)
    assert jnp.allclose(out, ref, atol=3e-3, rtol=1e-3), (out, ref)

    # Case 2: bf16 activations, class weights, softmax=False (module defaults path).
    wts = [0.4, 0.3, 0.2, 0.1]
    inputs_bf16 = inputs.astype(jnp.bfloat16)
    out2 = jax.block_until_ready(dice_loss(inputs_bf16, target, weight=wts))
    ref2 = _dice_loss_ref(inputs_bf16.astype(jnp.float32), target, weight=wts)
    assert jnp.allclose(out2, ref2, atol=1e-4, rtol=1e-4), (out2, ref2)

    # Case 3: spatial size not a multiple of 128 (exercises padding + softmax pad mask).
    B3, C3, H3, W3 = 2, 3, 10, 10
    inputs3 = jax.random.normal(k3, (B3, C3, H3, W3), jnp.float32)
    target3 = jax.random.randint(k4, (B3, H3, W3), 0, C3, jnp.int32)
    out3 = jax.block_until_ready(dice_loss(inputs3, target3, softmax=True))
    ref3 = _dice_loss_ref(inputs3, target3, softmax=True)
    assert jnp.allclose(out3, ref3, atol=3e-3, rtol=1e-3), (out3, ref3)

    print("KERNEL_OK")
</pallas_src>

<mosaic_0001>
module attributes {stable_mosaic.version = 11 : i64} {
  func.func @_dice_loss_kernel(%arg0: i32, %arg1: i32, %arg2: memref<1x4x2x128xf32, #tpu.memory_space<vmem>>, %arg3: memref<1x2x128xi8, #tpu.memory_space<vmem>>, %arg4: memref<4x1xf32, #tpu.memory_space<vmem>>, %arg5: memref<1x1x128xf32, #tpu.memory_space<vmem>>, %arg6: memref<4x128xf32, #tpu.memory_space<vmem>>, %arg7: memref<4x128xf32, #tpu.memory_space<vmem>>, %arg8: memref<4x128xf32, #tpu.memory_space<vmem>>) attributes {dimension_semantics = [#tpu.dimension_semantics<parallel>, #tpu.dimension_semantics<arbitrary>], iteration_bounds = array<i64: 2, 1>, scalar_prefetch = 0 : i64, scratch_operands = 3 : i64, tpu.core_type = #tpu.core_type<tc>, window_params = [{transform_indices = @transform_0, window_bounds = array<i64: 1, 4, 2, 128>}, {transform_indices = @transform_1, window_bounds = array<i64: 1, 2, 128>}, {pipeline_mode = #tpu.pipeline_mode<synchronous>, transform_indices = @transform_2, window_bounds = array<i64: 4, 1>}, {transform_indices = @transform_3, window_bounds = array<i64: 1, 1, 128>}]} {
    %c0_i32 = arith.constant 0 : i32
    %0 = arith.cmpi eq, %arg1, %c0_i32 : i32
    %1 = arith.extui %0 : i1 to i32
    %c0_i32_0 = arith.constant 0 : i32
    %2 = arith.cmpi ne, %1, %c0_i32_0 : i32
    scf.if %2 {
      %cst_26 = arith.constant 0.000000e+00 : f32
      %43 = vector.broadcast %cst_26 : f32 to vector<4x128xf32>
      %c0_27 = arith.constant 0 : index
      %c0_28 = arith.constant 0 : index
      %44 = vector.load %arg6[%c0_27, %c0_28] : memref<4x128xf32, #tpu.memory_space<vmem>>, vector<4x128xf32>
      tpu.vector_store %arg6[%c0_27, %c0_28], %43 {strides = array<i32>} : memref<4x128xf32, #tpu.memory_space<vmem>>, vector<4x128xf32>,
      %cst_29 = arith.constant 0.000000e+00 : f32
      %45 = vector.broadcast %cst_29 : f32 to vector<4x128xf32>
      %c0_30 = arith.constant 0 : index
      %c0_31 = arith.constant 0 : index
      %46 = vector.load %arg7[%c0_30, %c0_31] : memref<4x128xf32, #tpu.memory_space<vmem>>, vector<4x128xf32>
      tpu.vector_store %arg7[%c0_30, %c0_31], %45 {strides = array<i32>} : memref<4x128xf32, #tpu.memory_space<vmem>>, vector<4x128xf32>,
      %cst_32 = arith.constant 0.000000e+00 : f32
      %47 = vector.broadcast %cst_32 : f32 to vector<4x128xf32>
      %c0_33 = arith.constant 0 : index
      %c0_34 = arith.constant 0 : index
      %48 = vector.load %arg8[%c0_33, %c0_34] : memref<4x128xf32, #tpu.memory_space<vmem>>, vector<4x128xf32>
      tpu.vector_store %arg8[%c0_33, %c0_34], %47 {strides = array<i32>} : memref<4x128xf32, #tpu.memory_space<vmem>>, vector<4x128xf32>,
    } else {
    }
    %c0 = arith.constant 0 : index
    %c0_1 = arith.constant 0 : index
    %c0_2 = arith.constant 0 : index
    %c0_3 = arith.constant 0 : index
    %3 = vector.load %arg2[%c0, %c0_1, %c0_2, %c0_3] : memref<1x4x2x128xf32, #tpu.memory_space<vmem>>, vector<1x4x2x128xf32>
    %4 = vector.shape_cast %3 : vector<1x4x2x128xf32> to vector<4x2x128xf32>
    %c0_4 = arith.constant 0 : index
    %c0_5 = arith.constant 0 : index
    %c0_6 = arith.constant 0 : index
    %5 = vector.load %arg3[%c0_4, %c0_5, %c0_6] : memref<1x2x128xi8, #tpu.memory_space<vmem>>, vector<1x2x128xi8>
    %6 = vector.shape_cast %5 : vector<1x2x128xi8> to vector<2x128xi8>
    %7 = arith.extsi %6 : vector<2x128xi8> to vector<2x128xi32>
    %cst = arith.constant dense<0xFF800000> : vector<2x128xf32>
    %8 = vector.multi_reduction <maximumf>, %4, %cst [0] : vector<4x2x128xf32> to vector<2x128xf32>
    %9 = vector.shape_cast %8 : vector<2x128xf32> to vector<1x2x128xf32>
    %10 = vector.broadcast %9 : vector<1x2x128xf32> to vector<4x2x128xf32>
    %11 = arith.subf %4, %10 : vector<4x2x128xf32>
    %12 = math.exp %11 : vector<4x2x128xf32>
    %cst_7 = arith.constant dense<0.000000e+00> : vector<2x128xf32>
    %13 = vector.multi_reduction <add>, %12, %cst_7 [0] : vector<4x2x128xf32> to vector<2x128xf32>
    %14 = vector.shape_cast %13 : vector<2x128xf32> to vector<1x2x128xf32>
    %15 = tpu.reciprocal %14 {approx = true} : vector<1x2x128xf32> -> vector<1x2x128xf32>
    %16 = vector.broadcast %15 : vector<1x2x128xf32> to vector<4x2x128xf32>
    %17 = arith.mulf %12, %16 : vector<4x2x128xf32>
    %18 = tpu.iota {dimensions = array<i32: 0>} : vector<4x1x1xi32>
    %19 = vector.shape_cast %7 : vector<2x128xi32> to vector<1x2x128xi32>
    %20 = vector.broadcast %19 : vector<1x2x128xi32> to vector<4x2x128xi32>
    %21 = vector.broadcast %18 : vector<4x1x1xi32> to vector<4x2x128xi32>
    %22 = arith.cmpi eq, %20, %21 : vector<4x2x128xi32>
    %c0_8 = arith.constant 0 : index
    %c0_9 = arith.constant 0 : index
    %23 = vector.load %arg6[%c0_8, %c0_9] : memref<4x128xf32, #tpu.memory_space<vmem>>, vector<4x128xf32>
    %cst_10 = arith.constant 0.000000e+00 : f32
    %24 = vector.broadcast %cst_10 : f32 to vector<4x2x128xf32>
    %25 = arith.select %22, %17, %24 : vector<4x2x128xi1>, vector<4x2x128xf32>
    %cst_11 = arith.constant dense<0.000000e+00> : vector<4x128xf32>
    %26 = vector.multi_reduction <add>, %25, %cst_11 [1] : vector<4x2x128xf32> to vector<4x128xf32>
    %27 = arith.addf %23, %26 : vector<4x128xf32>
    %c0_12 = arith.constant 0 : index
    %c0_13 = arith.constant 0 : index
    %28 = vector.load %arg6[%c0_12, %c0_13] : memref<4x128xf32, #tpu.memory_space<vmem>>, vector<4x128xf32>
    tpu.vector_store %arg6[%c0_12, %c0_13], %27 {strides = array<i32>} : memref<4x128xf32, #tpu.memory_space<vmem>>, vector<4x128xf32>,
    %c0_14 = arith.constant 0 : index
    %c0_15 = arith.constant 0 : index
    %29 = vector.load %arg7[%c0_14, %c0_15] : memref<4x128xf32, #tpu.memory_space<vmem>>, vector<4x128xf32>
    %30 = arith.extui %22 : vector<4x2x128xi1> to vector<4x2x128xi32>
    %31 = arith.sitofp %30 : vector<4x2x128xi32> to vector<4x2x128xf32>
    %cst_16 = arith.constant dense<0.000000e+00> : vector<4x128xf32>
    %32 = vector.multi_reduction <add>, %31, %cst_16 [1] : vector<4x2x128xf32> to vector<4x128xf32>
    %33 = arith.addf %29, %32 : vector<4x128xf32>
    %c0_17 = arith.constant 0 : index
    %c0_18 = arith.constant 0 : index
    %34 = vector.load %arg7[%c0_17, %c0_18] : memref<4x128xf32, #tpu.memory_space<vmem>>, vector<4x128xf32>
    tpu.vector_store %arg7[%c0_17, %c0_18], %33 {strides = array<i32>} : memref<4x128xf32, #tpu.memory_space<vmem>>, vector<4x128xf32>,
    %c0_19 = arith.constant 0 : index
    %c0_20 = arith.constant 0 : index
    %35 = vector.load %arg8[%c0_19, %c0_20] : memref<4x128xf32, #tpu.memory_space<vmem>>, vector<4x128xf32>
    %36 = arith.mulf %17, %17 : vector<4x2x128xf32>
    %cst_21 = arith.constant dense<0.000000e+00> : vector<4x128xf32>
    %37 = vector.multi_reduction <add>, %36, %cst_21 [1] : vector<4x2x128xf32> to vector<4x128xf32>
    %38 = arith.addf %35, %37 : vector<4x128xf32>
    %c0_22 = arith.constant 0 : index
    %c0_23 = arith.constant 0 : index
    %39 = vector.load %arg8[%c0_22, %c0_23] : memref<4x128xf32, #tpu.memory_space<vmem>>, vector<4x128xf32>
    tpu.vector_store %arg8[%c0_22, %c0_23], %38 {strides = array<i32>} : memref<4x128xf32, #tpu.memory_space<vmem>>, vector<4x128xf32>,
    %c0_i32_24 = arith.constant 0 : i32
    %40 = arith.cmpi eq, %arg1, %c0_i32_24 : i32
    %41 = arith.extui %40 : i1 to i32
    %c0_i32_25 = arith.constant 0 : i32
    %42 = arith.cmpi ne, %41, %c0_i32_25 : i32
    scf.if %42 {
      %c0_26 = arith.constant 0 : index
      %c0_27 = arith.constant 0 : index
      %43 = vector.load %arg6[%c0_26, %c0_27] : memref<4x128xf32, #tpu.memory_space<vmem>>, vector<4x128xf32>
      %cst_28 = arith.constant dense<0.000000e+00> : vector<4xf32>
      %44 = vector.multi_reduction <add>, %43, %cst_28 [1] : vector<4x128xf32> to vector<4xf32>
      %45 = vector.shape_cast %44 : vector<4xf32> to vector<4x1xf32>
      %c0_29 = arith.constant 0 : index
      %c0_30 = arith.constant 0 : index
      %46 = vector.load %arg7[%c0_29, %c0_30] : memref<4x128xf32, #tpu.memory_space<vmem>>, vector<4x128xf32>
      %cst_31 = arith.constant dense<0.000000e+00> : vector<4xf32>
      %47 = vector.multi_reduction <add>, %46, %cst_31 [1] : vector<4x128xf32> to vector<4xf32>
      %48 = vector.shape_cast %47 : vector<4xf32> to vector<4x1xf32>
      %c0_32 = arith.constant 0 : index
      %c0_33 = arith.constant 0 : index
      %49 = vector.load %arg8[%c0_32, %c0_33] : memref<4x128xf32, #tpu.memory_space<vmem>>, vector<4x128xf32>
      %cst_34 = arith.constant dense<0.000000e+00> : vector<4xf32>
      %50 = vector.multi_reduction <add>, %49, %cst_34 [1] : vector<4x128xf32> to vector<4xf32>
      %51 = vector.shape_cast %50 : vector<4xf32> to vector<4x1xf32>
      %cst_35 = arith.constant 2.000000e+00 : f32
      %52 = vector.broadcast %cst_35 : f32 to vector<4x1xf32>
      %53 = arith.mulf %52, %45 : vector<4x1xf32>
      %cst_36 = arith.constant 9.99999974E-6 : f32
      %54 = vector.broadcast %cst_36 : f32 to vector<4x1xf32>
      %55 = arith.addf %53, %54 : vector<4x1xf32>
      %56 = arith.addf %51, %48 : vector<4x1xf32>
      %cst_37 = arith.constant 9.99999974E-6 : f32
      %57 = vector.broadcast %cst_37 : f32 to vector<4x1xf32>
      %58 = arith.addf %56, %57 : vector<4x1xf32>
      %59 = arith.divf %55, %58 : vector<4x1xf32>
      %cst_38 = arith.constant 1.000000e+00 : f32
      %60 = vector.broadcast %cst_38 : f32 to vector<4x1xf32>
      %61 = arith.subf %60, %59 : vector<4x1xf32>
      %c0_39 = arith.constant 0 : index
      %c0_40 = arith.constant 0 : index
      %62 = vector.load %arg4[%c0_39, %c0_40] : memref<4x1xf32, #tpu.memory_space<vmem>>, vector<4x1xf32>
      %63 = arith.mulf %61, %62 : vector<4x1xf32>
      %64 = vector.shape_cast %63 : vector<4x1xf32> to vector<1x4x1xf32>
      %cst_41 = arith.constant dense<0.000000e+00> : vector<1xf32>
      %65 = vector.multi_reduction <add>, %64, %cst_41 [1, 2] : vector<1x4x1xf32> to vector<1xf32>
      %66 = vector.shape_cast %65 : vector<1xf32> to vector<1x1x1xf32>
      %67 = vector.extract %66[0, 0, 0] : f32 from vector<1x1x1xf32>
      %cst_42 = arith.constant 4.000000e+00 : f32
      %68 = arith.divf %67, %cst_42 : f32
      %69 = vector.broadcast %68 : f32 to vector<1x1x128xf32>
      %c0_43 = arith.constant 0 : index
      %c0_44 = arith.constant 0 : index
      %c0_45 = arith.constant 0 : index
      %70 = vector.load %arg5[%c0_43, %c0_44, %c0_45] : memref<1x1x128xf32, #tpu.memory_space<vmem>>, vector<1x1x128xf32>
      tpu.vector_store %arg5[%c0_43, %c0_44, %c0_45], %69 {strides = array<i32>} : memref<1x1x128xf32, #tpu.memory_space<vmem>>, vector<1x1x128xf32>,
    } else {
    }
    return
  }
  func.func @transform_0(%arg0: i32, %arg1: i32) -> (i32, i32, i32, i32) {
    %c0_i32 = arith.constant 0 : i32
    %c0_i32_0 = arith.constant 0 : i32
    %c0_i32_1 = arith.constant 0 : i32
    return %arg0, %c0_i32, %arg1, %c0_i32_0 : i32, i32, i32, i32
  }
  func.func @transform_1(%arg0: i32, %arg1: i32) -> (i32, i32, i32) {
    %c0_i32 = arith.constant 0 : i32
    %c0_i32_0 = arith.constant 0 : i32
    return %arg0, %arg1, %c0_i32 : i32, i32, i32
  }
  func.func @transform_2(%arg0: i32, %arg1: i32) -> (i32, i32) {
    %c0_i32 = arith.constant 0 : i32
    %c0_i32_0 = arith.constant 0 : i32
    %c0_i32_1 = arith.constant 0 : i32
    return %c0_i32, %c0_i32_0 : i32, i32
  }
  func.func @transform_3(%arg0: i32, %arg1: i32) -> (i32, i32, i32) {
    %c0_i32 = arith.constant 0 : i32
    %c0_i32_0 = arith.constant 0 : i32
    %c0_i32_1 = arith.constant 0 : i32
    return %arg0, %c0_i32, %c0_i32_0 : i32, i32, i32
  }
}

</mosaic_0001>

<llo_original>
// kernel: tpu_custom_call.1
$region0: #{tpu_custom_call.1}
  #allocation0 [shape = 'u32[]', space=smem, size = 0x4, offset = 0x4, fixed_abs, tag = 'smem constant byte address 0x4 - core index']
  #allocation1 [shape = 'u32[144,128]{1,0:T(1,128)}', space=vmem, size = 0x12000, scoped, tag = 'internal scratch']
  #allocation2 [shape = 'f32[4,128]{1,0:T(4,128)}', space=vmem, size = 0x800, scoped, tag = 'scratch operand']
  #allocation3 [shape = 'f32[4,128]{1,0:T(4,128)}', space=vmem, size = 0x800, scoped, tag = 'scratch operand']
  #allocation4 [shape = 'f32[4,128]{1,0:T(4,128)}', space=vmem, size = 0x800, scoped, tag = 'scratch operand']
  %s0 = inlined_call_operand.hbm [shape: f32[2,4,2,128], index: 0, kind: input, shape index: {}]
  %s1 = inlined_call_operand.vmem [shape: s8[2,2,128], index: 1, kind: input, shape index: {}]
  %s2 = inlined_call_operand.vmem [shape: f32[4,1], index: 2, kind: input, shape index: {}]
  %s3 = inlined_call_operand.hbm [shape: f32[2,1,128], index: 3, kind: output, shape index: {}]
  %s4 = sld [smem:[#allocation0]]
  $region57: #{tpu_custom_call.1} parent=0
    _
  %s6 = ssub.s32 1, %s4
  %s7 = scalar_select 0, %s6, %s4
  $region1: #{tpu_custom_call.1} parent=0
    #allocation5 [shape = 'u8[8192]{0}', space=vmem, size = 0x2000, scoped, tag = 'input window, operand 0']
    #allocation6 [shape = 's32[2]{0}', space=sflag, size = 0x8, scoped, tag = 'scoped memory for tpu_custom_call.1']
    #allocation7 [shape = 's32[2]{0}', space=sflag, size = 0x8, scoped, tag = 'scoped memory for tpu_custom_call.1']
    #allocation8 [shape = 'u8[1024]{0}', space=vmem, size = 0x400, scoped, tag = 'output window, operand 0']
    %8 = vsyncpa [#allocation6], 0
    %s9 = scalar_lea.sflag [#allocation6], 1
    %10 = vsyncpa %s9, 0
    %11 = vsyncpa [#allocation7], 0
    %s12 = scalar_lea.sflag [#allocation7], 1
    %13 = vsyncpa %s12, 0
    loop: start=0, step=1, limit=4
    $region2: #{tpu_custom_call.1} parent=1 // loop_pre_header
      _
    $region3: #{tpu_custom_call.1} parent=1 // loop_header
      %s15 = sphi 0, %s19
      %p16 = scmp.ge.s32.totalorder %s15, 4
      %s22 = sphi 0, %s34
      %s23 = sphi 0, %s30
      %s24 = sphi 0, %s22
      %s25 = sphi 0, %s23
      %s26 = sphi 0, %s24
      %s27 = sphi 0, %s25
      %s39 = sphi 0, %s41
      %s42 = sphi 0, %s39
      %s43 = sphi 0, %s42
      %s59 = sphi 0, %s43
      %s67 = sphi 0, %s69
      %s70 = sphi 0, %s67
      %s71 = sphi 0, %s70
      %s87 = sphi 0, %s71
      %s91 = sphi 0, %s91
      %s93 = sphi 0, %s91
      %s94 = sphi 0, %s93
      %s108 = sphi 0, %s94
      %s114 = sphi 0, %s116
      %s117 = sphi 0, %s114
      %s118 = sphi 0, %s117
      %s134 = sphi 0, %s118
    $region4: #{tpu_custom_call.1} parent=1 // loop_header_branch
      %18 = sbr.rel (%p16) target = $region8
    $region5: #{tpu_custom_call.1} parent=1 // loop_body
      %s20 = ssub.s32 %s15, 1
      %s21 = ssub.s32 %s15, 2
      %s28 = sadd.s32 1, %s23
      %p29 = scmp.ge.s32.totalorder %s28, 1
      %s30 = scalar_select %p29, 0, %s28
      %s31 = sadd.s32 1, %s22
      %s32 = scalar_select %p29, %s31, %s22
      %p33 = scmp.ge.s32.totalorder %s32, 2
      %s34 = scalar_select %p33, 0, %s32
      %s35 = ssub.s32 %s22, %s34
      %s36 = ssub.s32 %s23, %s30
      %s37 = sor.u32 %s35, %s36
      %p38 = scmp.eq.s32.totalorder %s37, 0
      %s40 = sadd.s32 %s39, 1
      %s41 = scalar_select %p38, %s39, %s40
      %p44 = pneg %p38
      %p45 = scmp.eq.s32.totalorder %s15, 1
      %p46 = por %p44, %p45
      %p47 = scmp.ne.s32.totalorder %s39, %s42
      %p48 = scmp.eq.s32.totalorder %s15, 0
      %p49 = por %p47, %p48
      %p50 = scmp.ne.s32.totalorder %s39, %s42
      %p51 = scmp.eq.s32.totalorder %s20, 1
      %p52 = por %p50, %p51
      %p53 = scmp.ne.s32.totalorder %s42, %s43
      %p54 = scmp.eq.s32.totalorder %s20, 0
      %p55 = por %p53, %p54
      %p56 = scmp.ne.s32.totalorder %s42, %s43
      %p57 = scmp.eq.s32.totalorder %s21, 1
      %p58 = por %p56, %p57
      %p60 = scmp.ne.s32.totalorder %s43, %s59
      %p61 = scmp.eq.s32.totalorder %s21, 0
      %p62 = por %p60, %p61
      %s63 = ssub.s32 %s22, %s34
      %s64 = ssub.s32 %s23, %s30
      %s65 = sor.u32 %s63, %s64
      %p66 = scmp.eq.s32.totalorder %s65, 0
      %s68 = sadd.s32 %s67, 1
      %s69 = scalar_select %p66, %s67, %s68
      %p72 = pneg %p66
      %p73 = scmp.eq.s32.totalorder %s15, 1
      %p74 = por %p72, %p73
      %p75 = scmp.ne.s32.totalorder %s67, %s70
      %p76 = scmp.eq.s32.totalorder %s15, 0
      %p77 = por %p75, %p76
      %p78 = scmp.ne.s32.totalorder %s67, %s70
      %p79 = scmp.eq.s32.totalorder %s20, 1
      %p80 = por %p78, %p79
      %p81 = scmp.ne.s32.totalorder %s70, %s71
      %p82 = scmp.eq.s32.totalorder %s20, 0
      %p83 = por %p81, %p82
      %p84 = scmp.ne.s32.totalorder %s70, %s71
      %p85 = scmp.eq.s32.totalorder %s21, 1
      %p86 = por %p84, %p85
      %p88 = scmp.ne.s32.totalorder %s71, %s87
      %p89 = scmp.eq.s32.totalorder %s21, 0
      %p90 = por %p88, %p89
      %s92 = sadd.s32 %s91, 1
      %p95 = scmp.eq.s32.totalorder %s15, 1
      %p96 = scmp.ne.s32.totalorder %s91, %s93
      %p97 = scmp.eq.s32.totalorder %s15, 0
      %p98 = por %p96, %p97
      %p99 = scmp.ne.s32.totalorder %s91, %s93
      %p100 = scmp.eq.s32.totalorder %s20, 1
      %p101 = por %p99, %p100
      %p102 = scmp.ne.s32.totalorder %s93, %s94
      %p103 = scmp.eq.s32.totalorder %s20, 0
      %p104 = por %p102, %p103
      %p105 = scmp.ne.s32.totalorder %s93, %s94
      %p106 = scmp.eq.s32.totalorder %s21, 1
      %p107 = por %p105, %p106
      %p109 = scmp.ne.s32.totalorder %s94, %s108
      %p110 = scmp.eq.s32.totalorder %s21, 0
      %p111 = por %p109, %p110
      %s112 = ssub.s32 %s22, %s34
      %p113 = scmp.eq.s32.totalorder %s112, 0
      %s115 = sadd.s32 %s114, 1
      %s116 = scalar_select %p113, %s114, %s115
      %p119 = pneg %p113
      %p120 = scmp.eq.s32.totalorder %s15, 1
      %p121 = por %p119, %p120
      %p122 = scmp.ne.s32.totalorder %s114, %s117
      %p123 = scmp.eq.s32.totalorder %s15, 0
      %p124 = por %p122, %p123
      %p125 = scmp.ne.s32.totalorder %s114, %s117
      %p126 = scmp.eq.s32.totalorder %s20, 1
      %p127 = por %p125, %p126
      %p128 = scmp.ne.s32.totalorder %s117, %s118
      %p129 = scmp.eq.s32.totalorder %s20, 0
      %p130 = por %p128, %p129
      %p131 = scmp.ne.s32.totalorder %s117, %s118
      %p132 = scmp.eq.s32.totalorder %s21, 1
      %p133 = por %p131, %p132
      %p135 = scmp.ne.s32.totalorder %s118, %s134
      %p136 = scmp.eq.s32.totalorder %s21, 0
      %p137 = por %p135, %p136
      %p138 = scmp.le.s32.totalorder 1, %s15
      %p139 = scmp.lt.s32.totalorder %s15, 3
      %p140 = pnand %p138, %p139
      %p141 = pneg %p140
      // Predicated region
      $region9: #{tpu_custom_call.1} parent=5 // pred_check
        _
      $region10: #{tpu_custom_call.1} parent=5 // pred_check_branch
        %143 = sbr.rel (%p140) target = $region12
      $region11: #{tpu_custom_call.1} parent=5 // pred_region
        %s144 = ssub.s32 %s15, 1
        // Predicated region
        $region13: #{tpu_custom_call.1} parent=11 // pred_check
          %p145 = pneg %p104
        $region14: #{tpu_custom_call.1} parent=11 // pred_check_branch
          %147 = sbr.rel (%p145) target = $region16
        $region15: #{tpu_custom_call.1} parent=11 // pred_region
          _
        $region16: #{tpu_custom_call.1} parent=11 // pred_fallthru
          _
      $region12: #{tpu_custom_call.1} parent=5 // pred_fallthru
        _
      %p148 = scmp.lt.s32.totalorder %s15, 2
      // Predicated region
      $region17: #{tpu_custom_call.1} parent=5 // pred_check
        %p149 = pneg %p148
      $region18: #{tpu_custom_call.1} parent=5 // pred_check_branch
        %151 = sbr.rel (%p149) target = $region20
      $region19: #{tpu_custom_call.1} parent=5 // pred_region
        // Predicated region
        $region21: #{tpu_custom_call.1} parent=19 // pred_check
          %p152 = pneg %p49
        $region22: #{tpu_custom_call.1} parent=19 // pred_check_branch
          %154 = sbr.rel (%p152) target = $region24
        $region23: #{tpu_custom_call.1} parent=19 // pred_region
          %s155 = sand.u32 %s39, 1
          %s156 = scalar_lea.sflag [#allocation6], %s155
          %s157 = sand.u32 %s39, 1
          %s158 = smul.addr %s157, 8
          %s159 = scalar_lea.vmem [#allocation5], %s158
          %s161 = ssub.s32 128, 128
          %162 = vsyncadd %s156, %s161
          %s163 = smul.addr %s22, 4
          %s164 = sadd.s32 %s23, %s163
          %s165 = smul.addr %s164, 32
          %s166 = scalar_lea.hbm %s0, %s165
          %s167 = sshll.u32 %s159, 4
          %s168 = int_to_ptr.vmem [resolvable:$true] %s167
          %173 = dma.hbm_to_vmem [thread:$0]  %s166, 128, %s168, %s156, 32, 32, 2
        $region24: #{tpu_custom_call.1} parent=19 // pred_fallthru
          _
        // Predicated region
        $region25: #{tpu_custom_call.1} parent=19 // pred_check
          %p174 = pneg %p77
        $region26: #{tpu_custom_call.1} parent=19 // pred_check_branch
          %176 = sbr.rel (%p174) target = $region28
        $region27: #{tpu_custom_call.1} parent=19 // pred_region
          %p177 = scmp.lt.s32.totalorder %s22, 1
          %s178 = scalar_select %p177, %s22, 1
          %p179 = scmp.lt.s32.totalorder %s23, 0
          %s180 = scalar_select %p179, %s23, 0
          %s181 = sadd.s32 %s180, %s178
          %s182 = scalar_lea.vmem %s1, %s181
        $region28: #{tpu_custom_call.1} parent=19 // pred_fallthru
          _
      $region20: #{tpu_custom_call.1} parent=5 // pred_fallthru
        _
      %p183 = scmp.le.s32.totalorder 1, %s15
      %p184 = scmp.lt.s32.totalorder %s15, 3
      %p185 = pnand %p183, %p184
      %p186 = pneg %p185
      // Predicated region
      $region29: #{tpu_custom_call.1} parent=5 // pred_check
        _
      $region30: #{tpu_custom_call.1} parent=5 // pred_check_branch
        %188 = sbr.rel (%p185) target = $region32
      $region31: #{tpu_custom_call.1} parent=5 // pred_region
        %s189 = ssub.s32 %s15, 1
        %s190 = sand.u32 %s42, 1
        %s191 = scalar_lea.sflag [#allocation6], %s190
        %s192 = sand.u32 %s42, 1
        %s193 = smul.addr %s192, 8
        %s194 = scalar_lea.vmem [#allocation5], %s193
        // Predicated region
        $region33: #{tpu_custom_call.1} parent=31 // pred_check
          %p195 = pneg %p55
        $region34: #{tpu_custom_call.1} parent=31 // pred_check_branch
          %197 = sbr.rel (%p195) target = $region36
        $region35: #{tpu_custom_call.1} parent=31 // pred_region
          %198 = dma.done %s191, 128
        $region36: #{tpu_custom_call.1} parent=31 // pred_fallthru
          _
        %s199 = sand.u32 %s42, 1
        %s200 = scalar_lea.sflag [#allocation6], %s199
        %s201 = sand.u32 %s42, 1
        %s202 = smul.addr %s201, 8
        %s203 = scalar_lea.vmem [#allocation5], %s202
        %p204 = pneg %p55
        %p205 = pneg %p52
        %p206 = scmp.lt.s32.totalorder %s24, 1
        %s207 = scalar_select %p206, %s24, 1
        %p208 = scmp.lt.s32.totalorder %s25, 0
        %s209 = scalar_select %p208, %s25, 0
        %s210 = sadd.s32 %s209, %s207
        %s211 = scalar_lea.vmem %s1, %s210
        %p212 = pneg %p83
        %p213 = pneg %p80
        %p214 = pneg %p104
        %p215 = pneg %p101
        %p216 = pneg %p130
        %p217 = pneg %p127
        %s218 = sand.u32 %s117, 1
        %s219 = scalar_lea.sflag [#allocation7], %s218
        %s220 = sand.u32 %s117, 1
        %s221 = scalar_lea.vmem [#allocation8], %s220
        %p222 = scmp.lt.s32.totalorder %s24, 1
        %s223 = scalar_select %p222, %s24, 1
        %p224 = scmp.lt.s32.totalorder %s25, 0
        %s225 = scalar_select %p224, %s25, 0
        %s226 = sadd.s32 %s225, %s223
        %s227 = scalar_lea.vmem %s1, %s226
        %p228 = scmp.eq.s32.totalorder %s25, 0
        // Predicated region
        $region37: #{tpu_custom_call.1} parent=31 // pred_check
          %p229 = pneg %p228
        $region38: #{tpu_custom_call.1} parent=31 // pred_check_branch
          %231 = sbr.rel (%p229) target = $region40
        $region39: #{tpu_custom_call.1} parent=31 // pred_region
          %232 = vst [vmem:[#allocation2] sm:$0xf] 0.0
          %233 = vst [vmem:[#allocation3] sm:$0xf] 0.0
          %234 = vst [vmem:[#allocation4] sm:$0xf] 0.0
        $region40: #{tpu_custom_call.1} parent=31 // pred_fallthru
          _
        %v235 = vld [vmem:[%s194] sm:$0x3]
        %v236 = vld [vmem:[%s194 + $0x2] sm:$0x3]
        %v237 = vld [vmem:[%s194 + $0x4] sm:$0x3]
        %v238 = vld [vmem:[%s194 + $0x6] sm:$0x3]
        %v239 = vld [vmem:[%s227] sm:$0x1]
        %v240 = vunpack.c.0.s8 %v239
        %vm241 = vcmask 1041408
        %v242 = vsel %vm241, %v235, -inf
        %v243 = vsel %vm241, %v236, -inf
        %v244 = vsel %vm241, %v237, -inf
        %v245 = vsel %vm241, %v238, -inf
        %v246 = vmax.f32 %v242, %v243
        %v247 = vmax.f32 %v244, %v245
        %v248 = vmax.f32 %v246, %v247
        %v249 = vsub.f32 %v235, %v248
        %v250 = vsub.f32 %v236, %v248
        %v251 = vsub.f32 %v237, %v248
        %v252 = vsub.f32 %v238, %v248
        %v253 = vmul.f32 %v249, 1.442695
        %v254 = vpow.pop %v253
        %v255 = vmul.f32 %v250, 1.442695
        %v256 = vpow.pop %v255
        %v257 = vmul.f32 %v251, 1.442695
        %v258 = vpow.pop %v257
        %v259 = vmul.f32 %v252, 1.442695
        %v260 = vpow.pop %v259
        %v261 = vsel %vm241, %v254, 0.0
        %v262 = vsel %vm241, %v256, 0.0
        %v263 = vadd.f32 %v261, %v262
        %v264 = vsel %vm241, %v258, 0.0
        %v265 = vadd.f32 %v263, %v264
        %v266 = vsel %vm241, %v260, 0.0
        %v267 = vadd.f32 %v265, %v266
        %v268 = vrcp.pop %v267
        %v269 = vmul.f32 %v254, %v268
        %v270 = vmul.f32 %v256, %v268
        %v271 = vmul.f32 %v258, %v268
        %v272 = vmul.f32 %v260, %v268
        %vm273 = vcmp.eq.s32.totalorder %v240, 0
        %vm274 = vcmp.eq.s32.totalorder %v240, 1
        %vm275 = vcmp.eq.s32.totalorder %v240, 2
        %vm276 = vcmp.eq.s32.totalorder %v240, 3
        %v277 = vld [vmem:[#allocation2] sm:$0xf]
        %v278 = vsel %vm273, %v269, 0.0
        %v279 = vsel %vm274, %v270, 0.0
        %v280 = vsel %vm275, %v271, 0.0
        %v281 = vsel %vm276, %v272, 0.0
        %v282 = vsel %vm241, %v278, 0.0
        %v283 = vrot.slane %v282, 4
        %v284 = vadd.f32 %v282, %v283
        %v285 = vrot.slane %v284, 2
        %v286 = vadd.f32 %v284, %v285
        %v287 = vrot.slane %v286, 1
        %v288 = vadd.f32 %v286, %v287
        %v289 = vsel %vm241, %v279, 0.0
        %v290 = vrot.slane %v289, 4
        %v291 = vadd.f32 %v289, %v290
        %v292 = vrot.slane %v291, 2
        %v293 = vadd.f32 %v291, %v292
        %v294 = vrot.slane %v293, 1
        %v295 = vadd.f32 %v293, %v294
        %v296 = vsel %vm241, %v280, 0.0
        %v297 = vrot.slane %v296, 4
        %v298 = vadd.f32 %v296, %v297
        %v299 = vrot.slane %v298, 2
        %v300 = vadd.f32 %v298, %v299
        %v301 = vrot.slane %v300, 1
        %v302 = vadd.f32 %v300, %v301
        %v303 = vsel %vm241, %v281, 0.0
        %v304 = vrot.slane %v303, 4
        %v305 = vadd.f32 %v303, %v304
        %v306 = vrot.slane %v305, 2
        %v307 = vadd.f32 %v305, %v306
        %v308 = vrot.slane %v307, 1
        %v309 = vadd.f32 %v307, %v308
        %vm314 = vcmask 1041409
        %v315 = vsel %vm314, %v295, %v288
        %vm316 = vcmask 1042434
        %v317 = vsel %vm316, %v302, %v315
        %vm318 = vcmask 1043459
        %v319 = vsel %vm318, %v309, %v317
        %v321 = vadd.f32 %v277, %v319
        %322 = vst [vmem:[#allocation2] sm:$0xf] %v321
        %v323 = vld [vmem:[#allocation3] sm:$0xf]
        %v324 = vsel %vm273, 1, 0
        %v325 = vsel %vm274, 1, 0
        %v326 = vsel %vm275, 1, 0
        %v327 = vsel %vm276, 1, 0
        %v328 = vcvt.s32.f32 %v324
        %v329 = vcvt.s32.f32 %v325
        %v330 = vcvt.s32.f32 %v326
        %v331 = vcvt.s32.f32 %v327
        %v332 = vsel %vm241, %v328, 0.0
        %v333 = vrot.slane %v332, 4
        %v334 = vadd.f32 %v332, %v333
        %v335 = vrot.slane %v334, 2
        %v336 = vadd.f32 %v334, %v335
        %v337 = vrot.slane %v336, 1
        %v338 = vadd.f32 %v336, %v337
        %v339 = vsel %vm241, %v329, 0.0
        %v340 = vrot.slane %v339, 4
        %v341 = vadd.f32 %v339, %v340
        %v342 = vrot.slane %v341, 2
        %v343 = vadd.f32 %v341, %v342
        %v344 = vrot.slane %v343, 1
        %v345 = vadd.f32 %v343, %v344
        %v346 = vsel %vm241, %v330, 0.0
        %v347 = vrot.slane %v346, 4
        %v348 = vadd.f32 %v346, %v347
        %v349 = vrot.slane %v348, 2
        %v350 = vadd.f32 %v348, %v349
        %v351 = vrot.slane %v350, 1
        %v352 = vadd.f32 %v350, %v351
        %v353 = vsel %vm241, %v331, 0.0
        %v354 = vrot.slane %v353, 4
        %v355 = vadd.f32 %v353, %v354
        %v356 = vrot.slane %v355, 2
        %v357 = vadd.f32 %v355, %v356
        %v358 = vrot.slane %v357, 1
        %v359 = vadd.f32 %v357, %v358
        %v364 = vsel %vm314, %v345, %v338
        %v365 = vsel %vm316, %v352, %v364
        %v366 = vsel %vm318, %v359, %v365
        %v368 = vadd.f32 %v323, %v366
        %369 = vst [vmem:[#allocation3] sm:$0xf] %v368
        %v370 = vld [vmem:[#allocation4] sm:$0xf]
        %v371 = vmul.f32 %v269, %v269
        %v372 = vmul.f32 %v270, %v270
        %v373 = vmul.f32 %v271, %v271
        %v374 = vmul.f32 %v272, %v272
        %v375 = vsel %vm241, %v371, 0.0
        %v376 = vrot.slane %v375, 4
        %v377 = vadd.f32 %v375, %v376
        %v378 = vrot.slane %v377, 2
        %v379 = vadd.f32 %v377, %v378
        %v380 = vrot.slane %v379, 1
        %v381 = vadd.f32 %v379, %v380
        %v382 = vsel %vm241, %v372, 0.0
        %v383 = vrot.slane %v382, 4
        %v384 = vadd.f32 %v382, %v383
        %v385 = vrot.slane %v384, 2
        %v386 = vadd.f32 %v384, %v385
        %v387 = vrot.slane %v386, 1
        %v388 = vadd.f32 %v386, %v387
        %v389 = vsel %vm241, %v373, 0.0
        %v390 = vrot.slane %v389, 4
        %v391 = vadd.f32 %v389, %v390
        %v392 = vrot.slane %v391, 2
        %v393 = vadd.f32 %v391, %v392
        %v394 = vrot.slane %v393, 1
        %v395 = vadd.f32 %v393, %v394
        %v396 = vsel %vm241, %v374, 0.0
        %v397 = vrot.slane %v396, 4
        %v398 = vadd.f32 %v396, %v397
        %v399 = vrot.slane %v398, 2
        %v400 = vadd.f32 %v398, %v399
        %v401 = vrot.slane %v400, 1
        %v402 = vadd.f32 %v400, %v401
        %v407 = vsel %vm314, %v388, %v381
        %v408 = vsel %vm316, %v395, %v407
        %v409 = vsel %vm318, %v402, %v408
        %v411 = vadd.f32 %v370, %v409
        %412 = vst [vmem:[#allocation4] sm:$0xf] %v411
        // Predicated region
        $region41: #{tpu_custom_call.1} parent=31 // pred_check
          %p413 = pneg %p228
        $region42: #{tpu_custom_call.1} parent=31 // pred_check_branch
          %415 = sbr.rel (%p413) target = $region44
        $region43: #{tpu_custom_call.1} parent=31 // pred_region
          %v416 = vld [vmem:[#allocation2] sm:$0xf]
          %vm417 = vcmask 1043456
          %v418 = vsel %vm417, %v416, 0.0
          %419 = vadd.xlane.f32.xlu0 %v418
          %v420 = vpop.xlane.xlu0 %419
          %v421 = vld [vmem:[#allocation3] sm:$0xf]
          %v422 = vsel %vm417, %v421, 0.0
          %423 = vadd.xlane.f32.xlu0 %v422
          %v424 = vpop.xlane.xlu0 %423
          %v425 = vld [vmem:[#allocation4] sm:$0xf]
          %v426 = vsel %vm417, %v425, 0.0
          %427 = vadd.xlane.f32.xlu0 %v426
          %v428 = vpop.xlane.xlu0 %427
          %v429 = vmul.f32 %v420, 2.0
          %v430 = vadd.f32 %v429, 1e-05
          %v431 = vadd.f32 %v428, %v424
          %v432 = vadd.f32 %v431, 1e-05
          %v433 = vrcp.pop %v432
          %v434 = vmul.f32 %v430, %v433
          %v435 = vsub.f32 1.0, %v434
          %v436 = vld [vmem:[%s2] sm:$0xf]
          %v437 = vmul.f32 %v435, %v436
          %vm438 = vcmask 3072
          %v439 = vsel %vm438, %v437, 0.0
          %440 = vadd.xlane.f32.xlu0 %v439
          %v441 = vpop.xlane.xlu0 %440
          %v442 = vrot.slane %v441, 4
          %v443 = vadd.f32 %v441, %v442
          %v444 = vrot.slane %v443, 2
          %v445 = vadd.f32 %v443, %v444
          %v446 = vrot.slane %v445, 1
          %v447 = vadd.f32 %v445, %v446
          %s448 = vtos %v447
          %v449 = vrcp.pop 4.0
          %s450 = vtos %v449
          %s451 = smul.f32 %s448, %s450
          %v452 = vstv %s451
          %453 = vst [vmem:[%s221] sm:$0x1] %v452
        $region44: #{tpu_custom_call.1} parent=31 // pred_fallthru
          _
        %s454 = sand.u32 %s117, 1
        %s455 = scalar_lea.sflag [#allocation7], %s454
        %s456 = sand.u32 %s117, 1
        %s457 = scalar_lea.vmem [#allocation8], %s456
        // Predicated region
        $region45: #{tpu_custom_call.1} parent=31 // pred_check
          %p458 = pneg %p127
        $region46: #{tpu_custom_call.1} parent=31 // pred_check_branch
          %460 = sbr.rel (%p458) target = $region48
        $region47: #{tpu_custom_call.1} parent=31 // pred_region
          %s462 = ssub.s32 16, 16
          %463 = vsyncadd %s455, %s462
          %s464 = smul.addr %s24, 16
          %s465 = scalar_lea.hbm %s3, %s464
          %s467 = sshll.u32 %s457, 4
          %s468 = int_to_ptr.vmem [resolvable:$true] %s467
          %470 = dma.vmem_to_hbm [thread:$0]  %s468, 16, %s465, %s455
        $region48: #{tpu_custom_call.1} parent=31 // pred_fallthru
          _
      $region32: #{tpu_custom_call.1} parent=5 // pred_fallthru
        _
      %p471 = scmp.le.s32.totalorder 2, %s15
      // Predicated region
      $region49: #{tpu_custom_call.1} parent=5 // pred_check
        %p472 = pneg %p471
      $region50: #{tpu_custom_call.1} parent=5 // pred_check_branch
        %474 = sbr.rel (%p472) target = $region52
      $region51: #{tpu_custom_call.1} parent=5 // pred_region
        %s475 = ssub.s32 %s15, 2
        // Predicated region
        $region53: #{tpu_custom_call.1} parent=51 // pred_check
          %p476 = pneg %p133
        $region54: #{tpu_custom_call.1} parent=51 // pred_check_branch
          %478 = sbr.rel (%p476) target = $region56
        $region55: #{tpu_custom_call.1} parent=51 // pred_region
          %s479 = sand.u32 %s118, 1
          %s480 = scalar_lea.sflag [#allocation7], %s479
          %s481 = sand.u32 %s118, 1
          %s482 = scalar_lea.vmem [#allocation8], %s481
          %483 = dma.done %s480, 16
        $region56: #{tpu_custom_call.1} parent=51 // pred_fallthru
          _
      $region52: #{tpu_custom_call.1} parent=5 // pred_fallthru
        _
    $region6: #{tpu_custom_call.1} parent=1 // loop_footer
      %s19 = sadd.s32 1, %s15
    $region7: #{tpu_custom_call.1} parent=1 // loop_footer_branch
      %14 = sbr.rel target = $region3
    $region8: #{tpu_custom_call.1} parent=1 // loop_exit
      _
    %484 = vsyncpa [#allocation6], 1
    %s485 = scalar_lea.sflag [#allocation6], 1
    %486 = vsyncpa %s485, 1
    %487 = vsyncpa [#allocation7], 1
    %s488 = scalar_lea.sflag [#allocation7], 1
    %489 = vsyncpa %s488, 1

</llo_original>
